<compile_context>
chip_gen: v5e
topology: v5e:2x2
jax: 0.10.0
libtpu: 0.0.40
codegen_flags: <defaults>
</compile_context>

<pallas_src>
import functools

import numpy as np
import jax
import jax.numpy as jnp
from jax import lax
from jax.experimental import pallas as pl
from jax.experimental.pallas import tpu as pltpu


def positional_encoding(length, depth):
    """Exact port of PositionalEmbedding.positional_encoding (numpy)."""
    half = depth / 2
    positions = np.arange(length)[:, np.newaxis]              # (length, 1)
    depths = np.arange(half)[np.newaxis, :] / half            # (1, depth/2)
    angle_rates = 1.0 / (10000.0 ** depths)                   # (1, depth/2)
    angle_rads = positions * angle_rates                      # (length, depth/2)
    pos = np.concatenate([np.sin(angle_rads), np.cos(angle_rads)], axis=-1)
    return pos.astype(np.float32)                             # (length, depth)


# --------------------------------------------------------------------------- kernels

def _posemb_onehot_kernel(ids_ref, emb_ref, pos_ref, out_ref, *, scale, vocab_size):
    # ids_ref : (TL, 1) int32 VMEM tile of token ids for this (seq-chunk, batch)
    # emb_ref : (V, D)  f32 VMEM-resident embedding table (constant block index)
    # pos_ref : (TL, D) f32 positional-encoding tile for this sequence chunk
    # out_ref : (TL, D) f32 output tile (batch dim squeezed out by BlockSpec)
    ids = jnp.clip(ids_ref[...], 0, vocab_size - 1)                 # bounds-safe
    tl = ids.shape[0]
    vocab_iota = lax.broadcasted_iota(jnp.int32, (tl, vocab_size), 1)
    one_hot = (ids == vocab_iota).astype(jnp.float32)               # (TL, V)
    # precision=HIGHEST keeps the f32 table values exact through the MXU passes,
    # so this is an exact row gather (one_hot entries are exactly 0.0 / 1.0).
    gathered = jnp.dot(one_hot, emb_ref[...],
                       preferred_element_type=jnp.float32,
                       precision=lax.Precision.HIGHEST)             # (TL, D)
    out_ref[...] = gathered * scale + pos_ref[...]                  # one vectorized store


def _posemb_gather_kernel(ids_ref, emb_ref, pos_ref, out_ref, *,
                          scale, seq_len, tile_rows, vocab_size):
    # Fallback for large vocab (one-hot tile would not fit in VMEM).
    # ids_ref : (B*L,) int32 in SMEM (scalar-prefetched token ids)
    # TODO(synk): deliver ids per-tile (SMEM block) instead of whole-array scalar
    # prefetch for very long sequences / large batches.
    l = pl.program_id(0)
    b = pl.program_id(1)
    base = b * seq_len + l * tile_rows

    def body(r, carry):
        tok = jnp.clip(ids_ref[base + r], 0, vocab_size - 1)        # bounds-safe scalar
        out_ref[pl.ds(r, 1), :] = emb_ref[pl.ds(tok, 1), :]         # gather row -> out tile
        return carry

    unroll = 8 if tile_rows % 8 == 0 else True
    lax.fori_loop(0, tile_rows, body, 0, unroll=unroll)
    # Single vectorized epilogue over the whole tile (full-vreg VPU, unmasked stores).
    out_ref[...] = out_ref[...] * scale + pos_ref[...]


# --------------------------------------------------------------------------- wrapper

def _pick_tile_rows(L, max_rows):
    """Largest multiple-of-8 divisor of L that is <= max_rows, else full extent."""
    for cand in (512, 256, 128, 64, 32, 16, 8):
        if cand <= max_rows and L % cand == 0:
            return cand
    return L  # full-extent block is always layout-legal (covers small / odd L)


def positional_embedding_fwd(ids, emb_table, pos_enc, *,
                             max_rows_per_tile=512, use_onehot_gather=None):
    """ids: (B, L) int32; emb_table: (V, D) f32; pos_enc: (>=L, D) f32 -> (B, L, D) f32."""
    B, L = ids.shape
    V, D = emb_table.shape
    assert pos_enc.shape[0] >= L, "sequence length exceeds positional-encoding table (2048)"
    assert pos_enc.shape[1] == D

    TL = _pick_tile_rows(L, max_rows_per_tile)
    n_l = L // TL                                  # exact: TL divides L, or TL == L
    pos_used = jnp.asarray(pos_enc)[:L]            # (L, D): pos_encoding[:, :length, :]
    scale = float(np.sqrt(D))                      # torch: x *= sqrt(d_model)

    table_bytes = V * D * 4
    tile_bytes = TL * D * 4
    onehot_bytes = TL * V * 4
    if use_onehot_gather is None:
        # One-hot MXU gather only when its temporary stays small.
        use_onehot_gather = onehot_bytes <= 4 * 1024 * 1024

    # ---- generation-aware VMEM budget -------------------------------------------
    try:
        vmem_cap = int(pltpu.get_tpu_info().vmem_capacity_bytes)   # 128 MiB v5e/v6e, 64 MiB/TC v7x
    except Exception:
        vmem_cap = 64 * 1024 * 1024                                # conservative default
    headroom = 8 * 1024 * 1024                                     # Mosaic internal scratch

    single_buffer_table = table_bytes > 4 * 1024 * 1024            # pin big tables to 1 buffer
    table_buffers = 1 if single_buffer_table else 2
    vmem_needed = (table_buffers * table_bytes                     # resident embedding table
                   + 2 * tile_bytes                                # pos tile (double-buffered)
                   + 2 * tile_bytes                                # out tile (double-buffered)
                   + (2 * TL * 4 if use_onehot_gather else 0)      # ids tiles
                   + (onehot_bytes + tile_bytes if use_onehot_gather else 0)  # temporaries
                   + (1 << 20))                                    # slack
    if vmem_needed > vmem_cap - headroom:
        # TODO(synk): for vocabularies whose table does not fit in VMEM (or where
        # V*D >> B*L*D), implement a manual double-buffered HBM row-gather
        # (pl.ANY table + make_async_copy of only the needed rows).
        raise ValueError("embedding table / working set too large for VMEM residency")
    vmem_limit = int(min(max(vmem_needed, 32 * 1024 * 1024), vmem_cap - headroom))

    def _table_spec(index_map):
        if single_buffer_table:
            return pl.BlockSpec((V, D), index_map, pipeline_mode=pl.Buffered(1))
        return pl.BlockSpec((V, D), index_map)

    # ---- build grid spec + args per gather path ----------------------------------
    if use_onehot_gather:
        ids_3d = ids.reshape(B, L, 1).astype(jnp.int32)
        kernel = functools.partial(_posemb_onehot_kernel, scale=scale, vocab_size=V)
        grid_spec = pltpu.PrefetchScalarGridSpec(
            num_scalar_prefetch=0,
            grid=(n_l, B),                         # batch innermost -> pos tile reused
            in_specs=[
                pl.BlockSpec((None, TL, 1), lambda l, b: (b, l, 0)),   # per-tile ids
                _table_spec(lambda l, b: (0, 0)),                      # resident table
                pl.BlockSpec((TL, D), lambda l, b: (l, 0)),            # pos tile
            ],
            out_specs=pl.BlockSpec((None, TL, D), lambda l, b: (b, l, 0)),
        )
        args = (ids_3d, emb_table, pos_used)
    else:
        flat_ids = ids.reshape(B * L).astype(jnp.int32)
        kernel = functools.partial(_posemb_gather_kernel, scale=scale,
                                   seq_len=L, tile_rows=TL, vocab_size=V)
        grid_spec = pltpu.PrefetchScalarGridSpec(
            num_scalar_prefetch=1,                 # flat token ids land in SMEM
            grid=(n_l, B),
            in_specs=[
                _table_spec(lambda l, b, ids_sm: (0, 0)),
                pl.BlockSpec((TL, D), lambda l, b, ids_sm: (l, 0)),
            ],
            out_specs=pl.BlockSpec((None, TL, D), lambda l, b, ids_sm: (b, l, 0)),
        )
        args = (flat_ids, emb_table, pos_used)

    out = pl.pallas_call(
        kernel,
        out_shape=jax.ShapeDtypeStruct((B, L, D), jnp.float32),
        grid_spec=grid_spec,
        compiler_params=pltpu.CompilerParams(
            dimension_semantics=("parallel", "arbitrary"),
            vmem_limit_bytes=vmem_limit,
        ),
    )(*args)
    return out


# --------------------------------------------------------------------------- demo

if __name__ == "__main__":
    vocab_size = 96
    d_model = 128
    batch = 2
    seq_len = 256

    key = jax.random.PRNGKey(0)
    k_emb, k_ids = jax.random.split(key)

    # nn.Embedding default init ~ N(0, 1)
    emb_table = jax.random.normal(k_emb, (vocab_size, d_model), dtype=jnp.float32)
    pos_enc = jnp.asarray(positional_encoding(length=2048, depth=d_model))
    ids = jax.random.randint(k_ids, (batch, seq_len), 0, vocab_size, dtype=jnp.int32)

    # Pure-JAX reference.
    scale = jnp.float32(np.sqrt(d_model))
    ref = emb_table[ids] * scale + pos_enc[None, :seq_len, :]

    # max_rows_per_tile=128 only so this small demo exercises multiple seq chunks and
    # the batch axis; real callers should keep the 512 default (bigger tiles -> roofline).
    out1 = positional_embedding_fwd(ids, emb_table, pos_enc,
                                    max_rows_per_tile=128, use_onehot_gather=True)
    out1 = jax.block_until_ready(out1)
    assert out1.shape == (batch, seq_len, d_model) and out1.dtype == jnp.float32
    np.testing.assert_allclose(np.asarray(out1), np.asarray(ref), rtol=1e-6, atol=1e-5)

    # Also exercise the large-vocab fallback (scalar-prefetch gather + vectorized epilogue).
    out2 = positional_embedding_fwd(ids, emb_table, pos_enc,
                                    max_rows_per_tile=128, use_onehot_gather=False)
    out2 = jax.block_until_ready(out2)
    np.testing.assert_allclose(np.asarray(out2), np.asarray(ref), rtol=1e-6, atol=1e-5)

    print("KERNEL_OK")
</pallas_src>

<mosaic_0001>
module attributes {stable_mosaic.version = 11 : i64} {
  func.func @_posemb_onehot_kernel(%arg0: i32, %arg1: i32, %arg2: memref<1x128x1xi32, #tpu.memory_space<vmem>>, %arg3: memref<96x128xf32, #tpu.memory_space<vmem>>, %arg4: memref<128x128xf32, #tpu.memory_space<vmem>>, %arg5: memref<1x128x128xf32, #tpu.memory_space<vmem>>) attributes {dimension_semantics = [#tpu.dimension_semantics<parallel>, #tpu.dimension_semantics<arbitrary>], iteration_bounds = array<i64: 2, 2>, scalar_prefetch = 0 : i64, scratch_operands = 0 : i64, tpu.core_type = #tpu.core_type<tc>, window_params = [{transform_indices = @transform_0, window_bounds = array<i64: 1, 128, 1>}, {pipeline_mode = #tpu.pipeline_mode<synchronous>, transform_indices = @transform_1, window_bounds = array<i64: 96, 128>}, {transform_indices = @transform_2, window_bounds = array<i64: 128, 128>}, {transform_indices = @transform_3, window_bounds = array<i64: 1, 128, 128>}]} {
    %c0 = arith.constant 0 : index
    %c0_0 = arith.constant 0 : index
    %c0_1 = arith.constant 0 : index
    %0 = vector.load %arg2[%c0, %c0_0, %c0_1] : memref<1x128x1xi32, #tpu.memory_space<vmem>>, vector<1x128x1xi32>
    %1 = vector.shape_cast %0 : vector<1x128x1xi32> to vector<128x1xi32>
    %c0_i32 = arith.constant 0 : i32
    %c95_i32 = arith.constant 95 : i32
    %2 = vector.broadcast %c0_i32 : i32 to vector<128x1xi32>
    %3 = arith.maxsi %2, %1 : vector<128x1xi32>
    %4 = vector.broadcast %c95_i32 : i32 to vector<128x1xi32>
    %5 = arith.minsi %4, %3 : vector<128x1xi32>
    %6 = tpu.iota {dimensions = array<i32: 1>} : vector<128x96xi32>
    %7 = vector.broadcast %5 : vector<128x1xi32> to vector<128x96xi32>
    %8 = arith.cmpi eq, %7, %6 : vector<128x96xi32>
    %9 = arith.extui %8 : vector<128x96xi1> to vector<128x96xi32>
    %10 = arith.sitofp %9 : vector<128x96xi32> to vector<128x96xf32>
    %c0_2 = arith.constant 0 : index
    %c0_3 = arith.constant 0 : index
    %11 = vector.load %arg3[%c0_2, %c0_3] : memref<96x128xf32, #tpu.memory_space<vmem>>, vector<96x128xf32>
    %cst = arith.constant dense<0.000000e+00> : vector<128x128xf32>
    %12 = tpu.matmul %10, %11, %cst {dimension_numbers = #tpu.dot_dimension_numbers<[1], [0], [0], [1], [0, 0, 1, 1], [], []>, precision = #tpu.contract_precision<fp32>} : vector<128x96xf32>, vector<96x128xf32>, vector<128x128xf32> -> vector<128x128xf32>
    %cst_4 = arith.constant 11.3137083 : f32
    %13 = vector.broadcast %cst_4 : f32 to vector<128x128xf32>
    %14 = arith.mulf %12, %13 : vector<128x128xf32>
    %c0_5 = arith.constant 0 : index
    %c0_6 = arith.constant 0 : index
    %15 = vector.load %arg4[%c0_5, %c0_6] : memref<128x128xf32, #tpu.memory_space<vmem>>, vector<128x128xf32>
    %16 = arith.addf %14, %15 : vector<128x128xf32>
    %c0_7 = arith.constant 0 : index
    %c0_8 = arith.constant 0 : index
    %c0_9 = arith.constant 0 : index
    %17 = vector.load %arg5[%c0_7, %c0_8, %c0_9] : memref<1x128x128xf32, #tpu.memory_space<vmem>>, vector<1x128x128xf32>
    %18 = vector.shape_cast %17 : vector<1x128x128xf32> to vector<128x128xf32>
    %19 = vector.shape_cast %16 : vector<128x128xf32> to vector<1x128x128xf32>
    tpu.vector_store %arg5[%c0_7, %c0_8, %c0_9], %19 {strides = array<i32>} : memref<1x128x128xf32, #tpu.memory_space<vmem>>, vector<1x128x128xf32>,
    return
  }
  func.func @transform_0(%arg0: i32, %arg1: i32) -> (i32, i32, i32) {
    %c0_i32 = arith.constant 0 : i32
    %c0_i32_0 = arith.constant 0 : i32
    return %arg1, %arg0, %c0_i32 : i32, i32, i32
  }
  func.func @transform_1(%arg0: i32, %arg1: i32) -> (i32, i32) {
    %c0_i32 = arith.constant 0 : i32
    %c0_i32_0 = arith.constant 0 : i32
    %c0_i32_1 = arith.constant 0 : i32
    return %c0_i32, %c0_i32_0 : i32, i32
  }
  func.func @transform_2(%arg0: i32, %arg1: i32) -> (i32, i32) {
    %c0_i32 = arith.constant 0 : i32
    %c0_i32_0 = arith.constant 0 : i32
    return %arg0, %c0_i32 : i32, i32
  }
  func.func @transform_3(%arg0: i32, %arg1: i32) -> (i32, i32, i32) {
    %c0_i32 = arith.constant 0 : i32
    %c0_i32_0 = arith.constant 0 : i32
    return %arg1, %arg0, %c0_i32 : i32, i32, i32
  }
}

</mosaic_0001>

<llo_original>
// kernel: tpu_custom_call.1
$region0: #{tpu_custom_call.1}
  #allocation0 [shape = 'u32[]', space=smem, size = 0x4, offset = 0x4, fixed_abs, tag = 'smem constant byte address 0x4 - core index']
  #allocation1 [shape = 'u32[72,128]{1,0:T(1,128)}', space=vmem, size = 0x9000, scoped, tag = 'internal scratch']
  %s0 = inlined_call_operand.vmem [shape: s32[2,256,1], index: 0, kind: input, shape index: {}]
  %s1 = inlined_call_operand.vmem [shape: f32[96,128], index: 1, kind: input, shape index: {}]
  %s2 = inlined_call_operand.vmem [shape: f32[256,128], index: 2, kind: input, shape index: {}]
  %s3 = inlined_call_operand.hbm [shape: f32[2,256,128], index: 3, kind: output, shape index: {}]
  %s4 = sld [smem:[#allocation0]]
  $region45: #{tpu_custom_call.1} parent=0
    _
  %s6 = ssub.s32 1, %s4
  %s7 = scalar_select 0, %s6, %s4
  $region1: #{tpu_custom_call.1} parent=0
    #allocation2 [shape = 'u8[131072]{0}', space=vmem, size = 0x20000, scoped, tag = 'output window, operand 0']
    #allocation3 [shape = 's32[2]{0}', space=sflag, size = 0x8, scoped, tag = 'scoped memory for tpu_custom_call.1']
    %8 = vsyncpa [#allocation3], 0
    %s9 = scalar_lea.sflag [#allocation3], 1
    %10 = vsyncpa %s9, 0
    loop: start=0, step=1, limit=6
    $region2: #{tpu_custom_call.1} parent=1 // loop_pre_header
      _
    $region3: #{tpu_custom_call.1} parent=1 // loop_header
      %s12 = sphi 0, %s16
      %p13 = scmp.ge.s32.totalorder %s12, 6
      %s19 = sphi 0, %s31
      %s20 = sphi 0, %s27
      %s21 = sphi 0, %s19
      %s22 = sphi 0, %s20
      %s23 = sphi 0, %s21
      %s24 = sphi 0, %s22
      %s36 = sphi 0, %s38
      %s39 = sphi 0, %s36
      %s40 = sphi 0, %s39
      %s56 = sphi 0, %s40
      %s60 = sphi 0, %s60
      %s62 = sphi 0, %s60
      %s63 = sphi 0, %s62
      %s77 = sphi 0, %s63
      %s83 = sphi 0, %s85
      %s86 = sphi 0, %s83
      %s87 = sphi 0, %s86
      %s103 = sphi 0, %s87
      %s111 = sphi 0, %s113
      %s114 = sphi 0, %s111
      %s115 = sphi 0, %s114
      %s131 = sphi 0, %s115
    $region4: #{tpu_custom_call.1} parent=1 // loop_header_branch
      %15 = sbr.rel (%p13) target = $region8
    $region5: #{tpu_custom_call.1} parent=1 // loop_body
      %s17 = ssub.s32 %s12, 1
      %s18 = ssub.s32 %s12, 2
      %s25 = sadd.s32 1, %s20
      %p26 = scmp.ge.s32.totalorder %s25, 2
      %s27 = scalar_select %p26, 0, %s25
      %s28 = sadd.s32 1, %s19
      %s29 = scalar_select %p26, %s28, %s19
      %p30 = scmp.ge.s32.totalorder %s29, 2
      %s31 = scalar_select %p30, 0, %s29
      %s32 = ssub.s32 %s20, %s27
      %s33 = ssub.s32 %s19, %s31
      %s34 = sor.u32 %s32, %s33
      %p35 = scmp.eq.s32.totalorder %s34, 0
      %s37 = sadd.s32 %s36, 1
      %s38 = scalar_select %p35, %s36, %s37
      %p41 = pneg %p35
      %p42 = scmp.eq.s32.totalorder %s12, 3
      %p43 = por %p41, %p42
      %p44 = scmp.ne.s32.totalorder %s36, %s39
      %p45 = scmp.eq.s32.totalorder %s12, 0
      %p46 = por %p44, %p45
      %p47 = scmp.ne.s32.totalorder %s36, %s39
      %p48 = scmp.eq.s32.totalorder %s17, 3
      %p49 = por %p47, %p48
      %p50 = scmp.ne.s32.totalorder %s39, %s40
      %p51 = scmp.eq.s32.totalorder %s17, 0
      %p52 = por %p50, %p51
      %p53 = scmp.ne.s32.totalorder %s39, %s40
      %p54 = scmp.eq.s32.totalorder %s18, 3
      %p55 = por %p53, %p54
      %p57 = scmp.ne.s32.totalorder %s40, %s56
      %p58 = scmp.eq.s32.totalorder %s18, 0
      %p59 = por %p57, %p58
      %s61 = sadd.s32 %s60, 1
      %p64 = scmp.eq.s32.totalorder %s12, 3
      %p65 = scmp.ne.s32.totalorder %s60, %s62
      %p66 = scmp.eq.s32.totalorder %s12, 0
      %p67 = por %p65, %p66
      %p68 = scmp.ne.s32.totalorder %s60, %s62
      %p69 = scmp.eq.s32.totalorder %s17, 3
      %p70 = por %p68, %p69
      %p71 = scmp.ne.s32.totalorder %s62, %s63
      %p72 = scmp.eq.s32.totalorder %s17, 0
      %p73 = por %p71, %p72
      %p74 = scmp.ne.s32.totalorder %s62, %s63
      %p75 = scmp.eq.s32.totalorder %s18, 3
      %p76 = por %p74, %p75
      %p78 = scmp.ne.s32.totalorder %s63, %s77
      %p79 = scmp.eq.s32.totalorder %s18, 0
      %p80 = por %p78, %p79
      %s81 = ssub.s32 %s19, %s31
      %p82 = scmp.eq.s32.totalorder %s81, 0
      %s84 = sadd.s32 %s83, 1
      %s85 = scalar_select %p82, %s83, %s84
      %p88 = pneg %p82
      %p89 = scmp.eq.s32.totalorder %s12, 3
      %p90 = por %p88, %p89
      %p91 = scmp.ne.s32.totalorder %s83, %s86
      %p92 = scmp.eq.s32.totalorder %s12, 0
      %p93 = por %p91, %p92
      %p94 = scmp.ne.s32.totalorder %s83, %s86
      %p95 = scmp.eq.s32.totalorder %s17, 3
      %p96 = por %p94, %p95
      %p97 = scmp.ne.s32.totalorder %s86, %s87
      %p98 = scmp.eq.s32.totalorder %s17, 0
      %p99 = por %p97, %p98
      %p100 = scmp.ne.s32.totalorder %s86, %s87
      %p101 = scmp.eq.s32.totalorder %s18, 3
      %p102 = por %p100, %p101
      %p104 = scmp.ne.s32.totalorder %s87, %s103
      %p105 = scmp.eq.s32.totalorder %s18, 0
      %p106 = por %p104, %p105
      %s107 = ssub.s32 %s20, %s27
      %s108 = ssub.s32 %s19, %s31
      %s109 = sor.u32 %s107, %s108
      %p110 = scmp.eq.s32.totalorder %s109, 0
      %s112 = sadd.s32 %s111, 1
      %s113 = scalar_select %p110, %s111, %s112
      %p116 = pneg %p110
      %p117 = scmp.eq.s32.totalorder %s12, 3
      %p118 = por %p116, %p117
      %p119 = scmp.ne.s32.totalorder %s111, %s114
      %p120 = scmp.eq.s32.totalorder %s12, 0
      %p121 = por %p119, %p120
      %p122 = scmp.ne.s32.totalorder %s111, %s114
      %p123 = scmp.eq.s32.totalorder %s17, 3
      %p124 = por %p122, %p123
      %p125 = scmp.ne.s32.totalorder %s114, %s115
      %p126 = scmp.eq.s32.totalorder %s17, 0
      %p127 = por %p125, %p126
      %p128 = scmp.ne.s32.totalorder %s114, %s115
      %p129 = scmp.eq.s32.totalorder %s18, 3
      %p130 = por %p128, %p129
      %p132 = scmp.ne.s32.totalorder %s115, %s131
      %p133 = scmp.eq.s32.totalorder %s18, 0
      %p134 = por %p132, %p133
      %p135 = scmp.le.s32.totalorder 1, %s12
      %p136 = scmp.lt.s32.totalorder %s12, 5
      %p137 = pnand %p135, %p136
      %p138 = pneg %p137
      // Predicated region
      $region9: #{tpu_custom_call.1} parent=5 // pred_check
        _
      $region10: #{tpu_custom_call.1} parent=5 // pred_check_branch
        %140 = sbr.rel (%p137) target = $region12
      $region11: #{tpu_custom_call.1} parent=5 // pred_region
        %s141 = ssub.s32 %s12, 1
        // Predicated region
        $region13: #{tpu_custom_call.1} parent=11 // pred_check
          %p142 = pneg %p73
        $region14: #{tpu_custom_call.1} parent=11 // pred_check_branch
          %144 = sbr.rel (%p142) target = $region16
        $region15: #{tpu_custom_call.1} parent=11 // pred_region
          _
        $region16: #{tpu_custom_call.1} parent=11 // pred_fallthru
          _
      $region12: #{tpu_custom_call.1} parent=5 // pred_fallthru
        _
      %p145 = scmp.lt.s32.totalorder %s12, 4
      // Predicated region
      $region17: #{tpu_custom_call.1} parent=5 // pred_check
        %p146 = pneg %p145
      $region18: #{tpu_custom_call.1} parent=5 // pred_check_branch
        %148 = sbr.rel (%p146) target = $region20
      $region19: #{tpu_custom_call.1} parent=5 // pred_region
        // Predicated region
        $region21: #{tpu_custom_call.1} parent=19 // pred_check
          %p149 = pneg %p46
        $region22: #{tpu_custom_call.1} parent=19 // pred_check_branch
          %151 = sbr.rel (%p149) target = $region24
        $region23: #{tpu_custom_call.1} parent=19 // pred_region
          %s152 = smul.u32 16, %s19
          %p153 = scmp.lt.s32.totalorder %s20, 1
          %s154 = scalar_select %p153, %s20, 1
          %p155 = scmp.lt.s32.totalorder %s152, 31
          %s156 = scalar_select %p155, %s152, 31
          %s157 = smul.addr %s154, 32
          %s158 = sadd.s32 %s156, %s157
          %s159 = smul.addr %s158, 8
          %s160 = scalar_lea.vmem %s0, %s159
          %s161 = smul.u32 16, %s19
        $region24: #{tpu_custom_call.1} parent=19 // pred_fallthru
          _
        // Predicated region
        $region25: #{tpu_custom_call.1} parent=19 // pred_check
          %p162 = pneg %p93
        $region26: #{tpu_custom_call.1} parent=19 // pred_check_branch
          %164 = sbr.rel (%p162) target = $region28
        $region27: #{tpu_custom_call.1} parent=19 // pred_region
          %s165 = smul.u32 16, %s19
          %p166 = scmp.lt.s32.totalorder %s165, 31
          %s167 = scalar_select %p166, %s165, 31
          %s168 = smul.addr %s167, 8
          %s169 = scalar_lea.vmem %s2, %s168
          %s170 = smul.u32 16, %s19
        $region28: #{tpu_custom_call.1} parent=19 // pred_fallthru
          _
      $region20: #{tpu_custom_call.1} parent=5 // pred_fallthru
        _
      %p171 = scmp.le.s32.totalorder 1, %s12
      %p172 = scmp.lt.s32.totalorder %s12, 5
      %p173 = pnand %p171, %p172
      %p174 = pneg %p173
      // Predicated region
      $region29: #{tpu_custom_call.1} parent=5 // pred_check
        _
      $region30: #{tpu_custom_call.1} parent=5 // pred_check_branch
        %176 = sbr.rel (%p173) target = $region32
      $region31: #{tpu_custom_call.1} parent=5 // pred_region
        %s177 = ssub.s32 %s12, 1
        %s178 = smul.u32 16, %s21
        %p179 = scmp.lt.s32.totalorder %s22, 1
        %s180 = scalar_select %p179, %s22, 1
        %p181 = scmp.lt.s32.totalorder %s178, 31
        %s182 = scalar_select %p181, %s178, 31
        %s183 = smul.addr %s180, 32
        %s184 = sadd.s32 %s182, %s183
        %s185 = smul.addr %s184, 8
        %s186 = scalar_lea.vmem %s0, %s185
        %p187 = pneg %p52
        %p188 = pneg %p49
        %p189 = pneg %p73
        %p190 = pneg %p70
        %s191 = smul.u32 16, %s21
        %p192 = scmp.lt.s32.totalorder %s191, 31
        %s193 = scalar_select %p192, %s191, 31
        %s194 = smul.addr %s193, 8
        %s195 = scalar_lea.vmem %s2, %s194
        %p196 = pneg %p99
        %p197 = pneg %p96
        %p198 = pneg %p127
        %p199 = pneg %p124
        %s200 = sand.u32 %s114, 1
        %s201 = scalar_lea.sflag [#allocation3], %s200
        %s202 = sand.u32 %s114, 1
        %s203 = smul.addr %s202, 128
        %s204 = scalar_lea.vmem [#allocation2], %s203
        %s205 = smul.u32 16, %s21
        %p206 = scmp.lt.s32.totalorder %s22, 1
        %s207 = scalar_select %p206, %s22, 1
        %p208 = scmp.lt.s32.totalorder %s205, 31
        %s209 = scalar_select %p208, %s205, 31
        %s210 = smul.addr %s207, 32
        %s211 = sadd.s32 %s209, %s210
        %s212 = smul.addr %s211, 8
        %s213 = scalar_lea.vmem %s0, %s212
        %s214 = smul.u32 16, %s21
        %s215 = smul.u32 16, %s21
        %p216 = scmp.lt.s32.totalorder %s215, 31
        %s217 = scalar_select %p216, %s215, 31
        %s218 = smul.addr %s217, 8
        %s219 = scalar_lea.vmem %s2, %s218
        %s220 = smul.u32 16, %s21
        %s221 = smul.u32 16, %s21
        %v222 = vld [vmem:[%s213] sm:$0xff]
        %v223 = vld [vmem:[%s213 + $0x8] sm:$0xff]
        %v224 = vld [vmem:[%s213 + $0x10] sm:$0xff]
        %v225 = vld [vmem:[%s213 + $0x18] sm:$0xff]
        %v226 = vld [vmem:[%s213 + $0x20] sm:$0xff]
        %v227 = vld [vmem:[%s213 + $0x28] sm:$0xff]
        %v228 = vld [vmem:[%s213 + $0x30] sm:$0xff]
        %v229 = vld [vmem:[%s213 + $0x38] sm:$0xff]
        %v230 = vld [vmem:[%s213 + $0x40] sm:$0xff]
        %v231 = vld [vmem:[%s213 + $0x48] sm:$0xff]
        %v232 = vld [vmem:[%s213 + $0x50] sm:$0xff]
        %v233 = vld [vmem:[%s213 + $0x58] sm:$0xff]
        %v234 = vld [vmem:[%s213 + $0x60] sm:$0xff]
        %v235 = vld [vmem:[%s213 + $0x68] sm:$0xff]
        %v236 = vld [vmem:[%s213 + $0x70] sm:$0xff]
        %v237 = vld [vmem:[%s213 + $0x78] sm:$0xff]
        %vm238 = vcmp.gt.s32.totalorder %v222, 0
        %v239 = vsel %vm238, %v222, 0
        %vm240 = vcmp.gt.s32.totalorder %v223, 0
        %v241 = vsel %vm240, %v223, 0
        %vm242 = vcmp.gt.s32.totalorder %v224, 0
        %v243 = vsel %vm242, %v224, 0
        %vm244 = vcmp.gt.s32.totalorder %v225, 0
        %v245 = vsel %vm244, %v225, 0
        %vm246 = vcmp.gt.s32.totalorder %v226, 0
        %v247 = vsel %vm246, %v226, 0
        %vm248 = vcmp.gt.s32.totalorder %v227, 0
        %v249 = vsel %vm248, %v227, 0
        %vm250 = vcmp.gt.s32.totalorder %v228, 0
        %v251 = vsel %vm250, %v228, 0
        %vm252 = vcmp.gt.s32.totalorder %v229, 0
        %v253 = vsel %vm252, %v229, 0
        %vm254 = vcmp.gt.s32.totalorder %v230, 0
        %v255 = vsel %vm254, %v230, 0
        %vm256 = vcmp.gt.s32.totalorder %v231, 0
        %v257 = vsel %vm256, %v231, 0
        %vm258 = vcmp.gt.s32.totalorder %v232, 0
        %v259 = vsel %vm258, %v232, 0
        %vm260 = vcmp.gt.s32.totalorder %v233, 0
        %v261 = vsel %vm260, %v233, 0
        %vm262 = vcmp.gt.s32.totalorder %v234, 0
        %v263 = vsel %vm262, %v234, 0
        %vm264 = vcmp.gt.s32.totalorder %v235, 0
        %v265 = vsel %vm264, %v235, 0
        %vm266 = vcmp.gt.s32.totalorder %v236, 0
        %v267 = vsel %vm266, %v236, 0
        %vm268 = vcmp.gt.s32.totalorder %v237, 0
        %v269 = vsel %vm268, %v237, 0
        %vm270 = vcmp.lt.s32.totalorder %v239, 95
        %v271 = vsel %vm270, %v239, 95
        %vm272 = vcmp.lt.s32.totalorder %v241, 95
        %v273 = vsel %vm272, %v241, 95
        %vm274 = vcmp.lt.s32.totalorder %v243, 95
        %v275 = vsel %vm274, %v243, 95
        %vm276 = vcmp.lt.s32.totalorder %v245, 95
        %v277 = vsel %vm276, %v245, 95
        %vm278 = vcmp.lt.s32.totalorder %v247, 95
        %v279 = vsel %vm278, %v247, 95
        %vm280 = vcmp.lt.s32.totalorder %v249, 95
        %v281 = vsel %vm280, %v249, 95
        %vm282 = vcmp.lt.s32.totalorder %v251, 95
        %v283 = vsel %vm282, %v251, 95
        %vm284 = vcmp.lt.s32.totalorder %v253, 95
        %v285 = vsel %vm284, %v253, 95
        %vm286 = vcmp.lt.s32.totalorder %v255, 95
        %v287 = vsel %vm286, %v255, 95
        %vm288 = vcmp.lt.s32.totalorder %v257, 95
        %v289 = vsel %vm288, %v257, 95
        %vm290 = vcmp.lt.s32.totalorder %v259, 95
        %v291 = vsel %vm290, %v259, 95
        %vm292 = vcmp.lt.s32.totalorder %v261, 95
        %v293 = vsel %vm292, %v261, 95
        %vm294 = vcmp.lt.s32.totalorder %v263, 95
        %v295 = vsel %vm294, %v263, 95
        %vm296 = vcmp.lt.s32.totalorder %v265, 95
        %v297 = vsel %vm296, %v265, 95
        %vm298 = vcmp.lt.s32.totalorder %v267, 95
        %v299 = vsel %vm298, %v267, 95
        %vm300 = vcmp.lt.s32.totalorder %v269, 95
        %v301 = vsel %vm300, %v269, 95
        %v302 = vlaneseq
        %v303 = vand.u32 %v302, 127
        %304 = vset.pattern.permute.xlu0 0
        %305 = vperm.xlu0 %304, %v271
        %v306 = vpop.permute.xlu0 %305
        %307 = vset.pattern.permute.xlu0 0
        %308 = vperm.xlu0 %307, %v273
        %v309 = vpop.permute.xlu0 %308
        %310 = vset.pattern.permute.xlu0 0
        %311 = vperm.xlu0 %310, %v275
        %v312 = vpop.permute.xlu0 %311
        %313 = vset.pattern.permute.xlu0 0
        %314 = vperm.xlu0 %313, %v277
        %v315 = vpop.permute.xlu0 %314
        %316 = vset.pattern.permute.xlu0 0
        %317 = vperm.xlu0 %316, %v279
        %v318 = vpop.permute.xlu0 %317
        %319 = vset.pattern.permute.xlu0 0
        %320 = vperm.xlu0 %319, %v281
        %v321 = vpop.permute.xlu0 %320
        %322 = vset.pattern.permute.xlu0 0
        %323 = vperm.xlu0 %322, %v283
        %v324 = vpop.permute.xlu0 %323
        %325 = vset.pattern.permute.xlu0 0
        %326 = vperm.xlu0 %325, %v285
        %v327 = vpop.permute.xlu0 %326
        %328 = vset.pattern.permute.xlu0 0
        %329 = vperm.xlu0 %328, %v287
        %v330 = vpop.permute.xlu0 %329
        %331 = vset.pattern.permute.xlu0 0
        %332 = vperm.xlu0 %331, %v289
        %v333 = vpop.permute.xlu0 %332
        %334 = vset.pattern.permute.xlu0 0
        %335 = vperm.xlu0 %334, %v291
        %v336 = vpop.permute.xlu0 %335
        %337 = vset.pattern.permute.xlu0 0
        %338 = vperm.xlu0 %337, %v293
        %v339 = vpop.permute.xlu0 %338
        %340 = vset.pattern.permute.xlu0 0
        %341 = vperm.xlu0 %340, %v295
        %v342 = vpop.permute.xlu0 %341
        %343 = vset.pattern.permute.xlu0 0
        %344 = vperm.xlu0 %343, %v297
        %v345 = vpop.permute.xlu0 %344
        %346 = vset.pattern.permute.xlu0 0
        %347 = vperm.xlu0 %346, %v299
        %v348 = vpop.permute.xlu0 %347
        %349 = vset.pattern.permute.xlu0 0
        %350 = vperm.xlu0 %349, %v301
        %v351 = vpop.permute.xlu0 %350
        %vm352 = vcmp.eq.s32.totalorder %v306, %v303
        %vm353 = vcmp.eq.s32.totalorder %v309, %v303
        %vm354 = vcmp.eq.s32.totalorder %v312, %v303
        %vm355 = vcmp.eq.s32.totalorder %v315, %v303
        %vm356 = vcmp.eq.s32.totalorder %v318, %v303
        %vm357 = vcmp.eq.s32.totalorder %v321, %v303
        %vm358 = vcmp.eq.s32.totalorder %v324, %v303
        %vm359 = vcmp.eq.s32.totalorder %v327, %v303
        %vm360 = vcmp.eq.s32.totalorder %v330, %v303
        %vm361 = vcmp.eq.s32.totalorder %v333, %v303
        %vm362 = vcmp.eq.s32.totalorder %v336, %v303
        %vm363 = vcmp.eq.s32.totalorder %v339, %v303
        %vm364 = vcmp.eq.s32.totalorder %v342, %v303
        %vm365 = vcmp.eq.s32.totalorder %v345, %v303
        %vm366 = vcmp.eq.s32.totalorder %v348, %v303
        %vm367 = vcmp.eq.s32.totalorder %v351, %v303
        %v368 = vsel %vm352, 1, 0
        %v369 = vsel %vm353, 1, 0
        %v370 = vsel %vm354, 1, 0
        %v371 = vsel %vm355, 1, 0
        %v372 = vsel %vm356, 1, 0
        %v373 = vsel %vm357, 1, 0
        %v374 = vsel %vm358, 1, 0
        %v375 = vsel %vm359, 1, 0
        %v376 = vsel %vm360, 1, 0
        %v377 = vsel %vm361, 1, 0
        %v378 = vsel %vm362, 1, 0
        %v379 = vsel %vm363, 1, 0
        %v380 = vsel %vm364, 1, 0
        %v381 = vsel %vm365, 1, 0
        %v382 = vsel %vm366, 1, 0
        %v383 = vsel %vm367, 1, 0
        %v384 = vcvt.s32.f32 %v368
        %v385 = vcvt.s32.f32 %v369
        %v386 = vcvt.s32.f32 %v370
        %v387 = vcvt.s32.f32 %v371
        %v388 = vcvt.s32.f32 %v372
        %v389 = vcvt.s32.f32 %v373
        %v390 = vcvt.s32.f32 %v374
        %v391 = vcvt.s32.f32 %v375
        %v392 = vcvt.s32.f32 %v376
        %v393 = vcvt.s32.f32 %v377
        %v394 = vcvt.s32.f32 %v378
        %v395 = vcvt.s32.f32 %v379
        %v396 = vcvt.s32.f32 %v380
        %v397 = vcvt.s32.f32 %v381
        %v398 = vcvt.s32.f32 %v382
        %v399 = vcvt.s32.f32 %v383
        %v400 = vld [vmem:[%s1] sm:$0xff]
        %v401 = vld [vmem:[%s1 + $0x8] sm:$0xff]
        %v402 = vld [vmem:[%s1 + $0x10] sm:$0xff]
        %v403 = vld [vmem:[%s1 + $0x18] sm:$0xff]
        %v404 = vld [vmem:[%s1 + $0x20] sm:$0xff]
        %v405 = vld [vmem:[%s1 + $0x28] sm:$0xff]
        %v406 = vld [vmem:[%s1 + $0x30] sm:$0xff]
        %v407 = vld [vmem:[%s1 + $0x38] sm:$0xff]
        %v408 = vld [vmem:[%s1 + $0x40] sm:$0xff]
        %v409 = vld [vmem:[%s1 + $0x48] sm:$0xff]
        %v410 = vld [vmem:[%s1 + $0x50] sm:$0xff]
        %v411 = vld [vmem:[%s1 + $0x58] sm:$0xff]
        %vm412 = vcmask 785408
        %v414 = vsel %vm412, %v384, 0
        %v417 = vsel %vm412, %v385, 0
        %v420 = vsel %vm412, %v386, 0
        %v423 = vsel %vm412, %v387, 0
        %v426 = vsel %vm412, %v388, 0
        %v429 = vsel %vm412, %v389, 0
        %v432 = vsel %vm412, %v390, 0
        %v435 = vsel %vm412, %v391, 0
        %v438 = vsel %vm412, %v392, 0
        %v441 = vsel %vm412, %v393, 0
        %v444 = vsel %vm412, %v394, 0
        %v447 = vsel %vm412, %v395, 0
        %v450 = vsel %vm412, %v396, 0
        %v453 = vsel %vm412, %v397, 0
        %v456 = vsel %vm412, %v398, 0
        %v459 = vsel %vm412, %v399, 0
        %461 = vmatpush.msra.mxu0 0.0
        %462 = vmatpush.msra.mxu0 0.0
        %463 = vmatpush.msra.mxu0 0.0
        %464 = vmatpush.msra.mxu0 0.0
        %v465 = vand.u32 %v411, 4294901760
        %466 = vmatpush.msra.mxu0 %v465
        %v467 = vand.u32 %v410, 4294901760
        %468 = vmatpush.msra.mxu0 %v467
        %v469 = vand.u32 %v409, 4294901760
        %470 = vmatpush.msra.mxu0 %v469
        %v471 = vand.u32 %v408, 4294901760
        %472 = vmatpush.msra.mxu0 %v471
        %v473 = vand.u32 %v407, 4294901760
        %474 = vmatpush.msra.mxu0 %v473
        %v475 = vand.u32 %v406, 4294901760
        %476 = vmatpush.msra.mxu0 %v475
        %v477 = vand.u32 %v405, 4294901760
        %478 = vmatpush.msra.mxu0 %v477
        %v479 = vand.u32 %v404, 4294901760
        %480 = vmatpush.msra.mxu0 %v479
        %v481 = vand.u32 %v403, 4294901760
        %482 = vmatpush.msra.mxu0 %v481
        %v483 = vand.u32 %v402, 4294901760
        %484 = vmatpush.msra.mxu0 %v483
        %v485 = vand.u32 %v401, 4294901760
        %486 = vmatpush.msra.mxu0 %v485
        %v487 = vand.u32 %v400, 4294901760
        %488 = vmatpush.msra.mxu0 %v487
        %v489 = vand.u32 %v414, 4294901760
        %v490 = vsub.f32 %v414, %v489
        %v491 = vand.u32 %v490, 4294901760
        %v492 = vsub.f32 %v490, %v491
        %v493 = vand.u32 %v492, 4294901760
        %494 = vmatmul.f32.gmra.mxu0 %v493
        %v495 = vpop.f32.mrf.mxu0
        %v496 = vadd.f32 0.0, %v495
        %v497 = vand.u32 %v417, 4294901760
        %v498 = vsub.f32 %v417, %v497
        %v499 = vand.u32 %v498, 4294901760
        %v500 = vsub.f32 %v498, %v499
        %v501 = vand.u32 %v500, 4294901760
        %502 = vmatmul.f32.gmra.mxu0 %v501
        %v503 = vpop.f32.mrf.mxu0
        %v504 = vadd.f32 0.0, %v503
        %v505 = vand.u32 %v420, 4294901760
        %v506 = vsub.f32 %v420, %v505
        %v507 = vand.u32 %v506, 4294901760
        %v508 = vsub.f32 %v506, %v507
        %v509 = vand.u32 %v508, 4294901760
        %510 = vmatmul.f32.gmra.mxu0 %v509
        %v511 = vpop.f32.mrf.mxu0
        %v512 = vadd.f32 0.0, %v511
        %v513 = vand.u32 %v423, 4294901760
        %v514 = vsub.f32 %v423, %v513
        %v515 = vand.u32 %v514, 4294901760
        %v516 = vsub.f32 %v514, %v515
        %v517 = vand.u32 %v516, 4294901760
        %518 = vmatmul.f32.gmra.mxu0 %v517
        %v519 = vpop.f32.mrf.mxu0
        %v520 = vadd.f32 0.0, %v519
        %v521 = vand.u32 %v426, 4294901760
        %v522 = vsub.f32 %v426, %v521
        %v523 = vand.u32 %v522, 4294901760
        %v524 = vsub.f32 %v522, %v523
        %v525 = vand.u32 %v524, 4294901760
        %526 = vmatmul.f32.gmra.mxu0 %v525
        %v527 = vpop.f32.mrf.mxu0
        %v528 = vadd.f32 0.0, %v527
        %v529 = vand.u32 %v429, 4294901760
        %v530 = vsub.f32 %v429, %v529
        %v531 = vand.u32 %v530, 4294901760
        %v532 = vsub.f32 %v530, %v531
        %v533 = vand.u32 %v532, 4294901760
        %534 = vmatmul.f32.gmra.mxu0 %v533
        %v535 = vpop.f32.mrf.mxu0
        %v536 = vadd.f32 0.0, %v535
        %v537 = vand.u32 %v432, 4294901760
        %v538 = vsub.f32 %v432, %v537
        %v539 = vand.u32 %v538, 4294901760
        %v540 = vsub.f32 %v538, %v539
        %v541 = vand.u32 %v540, 4294901760
        %542 = vmatmul.f32.gmra.mxu0 %v541
        %v543 = vpop.f32.mrf.mxu0
        %v544 = vadd.f32 0.0, %v543
        %v545 = vand.u32 %v435, 4294901760
        %v546 = vsub.f32 %v435, %v545
        %v547 = vand.u32 %v546, 4294901760
        %v548 = vsub.f32 %v546, %v547
        %v549 = vand.u32 %v548, 4294901760
        %550 = vmatmul.f32.gmra.mxu0 %v549
        %v551 = vpop.f32.mrf.mxu0
        %v552 = vadd.f32 0.0, %v551
        %v553 = vand.u32 %v438, 4294901760
        %v554 = vsub.f32 %v438, %v553
        %v555 = vand.u32 %v554, 4294901760
        %v556 = vsub.f32 %v554, %v555
        %v557 = vand.u32 %v556, 4294901760
        %558 = vmatmul.f32.gmra.mxu0 %v557
        %v559 = vpop.f32.mrf.mxu0
        %v560 = vadd.f32 0.0, %v559
        %v561 = vand.u32 %v441, 4294901760
        %v562 = vsub.f32 %v441, %v561
        %v563 = vand.u32 %v562, 4294901760
        %v564 = vsub.f32 %v562, %v563
        %v565 = vand.u32 %v564, 4294901760
        %566 = vmatmul.f32.gmra.mxu0 %v565
        %v567 = vpop.f32.mrf.mxu0
        %v568 = vadd.f32 0.0, %v567
        %v569 = vand.u32 %v444, 4294901760
        %v570 = vsub.f32 %v444, %v569
        %v571 = vand.u32 %v570, 4294901760
        %v572 = vsub.f32 %v570, %v571
        %v573 = vand.u32 %v572, 4294901760
        %574 = vmatmul.f32.gmra.mxu0 %v573
        %v575 = vpop.f32.mrf.mxu0
        %v576 = vadd.f32 0.0, %v575
        %v577 = vand.u32 %v447, 4294901760
        %v578 = vsub.f32 %v447, %v577
        %v579 = vand.u32 %v578, 4294901760
        %v580 = vsub.f32 %v578, %v579
        %v581 = vand.u32 %v580, 4294901760
        %582 = vmatmul.f32.gmra.mxu0 %v581
        %v583 = vpop.f32.mrf.mxu0
        %v584 = vadd.f32 0.0, %v583
        %v585 = vand.u32 %v450, 4294901760
        %v586 = vsub.f32 %v450, %v585
        %v587 = vand.u32 %v586, 4294901760
        %v588 = vsub.f32 %v586, %v587
        %v589 = vand.u32 %v588, 4294901760
        %590 = vmatmul.f32.gmra.mxu0 %v589
        %v591 = vpop.f32.mrf.mxu0
        %v592 = vadd.f32 0.0, %v591
        %v593 = vand.u32 %v453, 4294901760
        %v594 = vsub.f32 %v453, %v593
        %v595 = vand.u32 %v594, 4294901760
        %v596 = vsub.f32 %v594, %v595
        %v597 = vand.u32 %v596, 4294901760
        %598 = vmatmul.f32.gmra.mxu0 %v597
        %v599 = vpop.f32.mrf.mxu0
        %v600 = vadd.f32 0.0, %v599
        %v601 = vand.u32 %v456, 4294901760
        %v602 = vsub.f32 %v456, %v601
        %v603 = vand.u32 %v602, 4294901760
        %v604 = vsub.f32 %v602, %v603
        %v605 = vand.u32 %v604, 4294901760
        %606 = vmatmul.f32.gmra.mxu0 %v605
        %v607 = vpop.f32.mrf.mxu0
        %v608 = vadd.f32 0.0, %v607
        %v609 = vand.u32 %v459, 4294901760
        %v610 = vsub.f32 %v459, %v609
        %v611 = vand.u32 %v610, 4294901760
        %v612 = vsub.f32 %v610, %v611
        %v613 = vand.u32 %v612, 4294901760
        %614 = vmatmul.f32.gmra.mxu0 %v613
        %v615 = vpop.f32.mrf.mxu0
        %v616 = vadd.f32 0.0, %v615
        %617 = vdwg.mxu0
        %618 = vmatpush.msra.mxu0 0.0
        %619 = vmatpush.msra.mxu0 0.0
        %620 = vmatpush.msra.mxu0 0.0
        %621 = vmatpush.msra.mxu0 0.0
        %v622 = vand.u32 %v411, 4294901760
        %v623 = vsub.f32 %v411, %v622
        %v624 = vand.u32 %v623, 4294901760
        %v625 = vsub.f32 %v623, %v624
        %v626 = vand.u32 %v625, 4294901760
        %627 = vmatpush.msra.mxu0 %v626
        %v628 = vand.u32 %v410, 4294901760
        %v629 = vsub.f32 %v410, %v628
        %v630 = vand.u32 %v629, 4294901760
        %v631 = vsub.f32 %v629, %v630
        %v632 = vand.u32 %v631, 4294901760
        %633 = vmatpush.msra.mxu0 %v632
        %v634 = vand.u32 %v409, 4294901760
        %v635 = vsub.f32 %v409, %v634
        %v636 = vand.u32 %v635, 4294901760
        %v637 = vsub.f32 %v635, %v636
        %v638 = vand.u32 %v637, 4294901760
        %639 = vmatpush.msra.mxu0 %v638
        %v640 = vand.u32 %v408, 4294901760
        %v641 = vsub.f32 %v408, %v640
        %v642 = vand.u32 %v641, 4294901760
        %v643 = vsub.f32 %v641, %v642
        %v644 = vand.u32 %v643, 4294901760
        %645 = vmatpush.msra.mxu0 %v644
        %v646 = vand.u32 %v407, 4294901760
        %v647 = vsub.f32 %v407, %v646
        %v648 = vand.u32 %v647, 4294901760
        %v649 = vsub.f32 %v647, %v648
        %v650 = vand.u32 %v649, 4294901760
        %651 = vmatpush.msra.mxu0 %v650
        %v652 = vand.u32 %v406, 4294901760
        %v653 = vsub.f32 %v406, %v652
        %v654 = vand.u32 %v653, 4294901760
        %v655 = vsub.f32 %v653, %v654
        %v656 = vand.u32 %v655, 4294901760
        %657 = vmatpush.msra.mxu0 %v656
        %v658 = vand.u32 %v405, 4294901760
        %v659 = vsub.f32 %v405, %v658
        %v660 = vand.u32 %v659, 4294901760
        %v661 = vsub.f32 %v659, %v660
        %v662 = vand.u32 %v661, 4294901760
        %663 = vmatpush.msra.mxu0 %v662
        %v664 = vand.u32 %v404, 4294901760
        %v665 = vsub.f32 %v404, %v664
        %v666 = vand.u32 %v665, 4294901760
        %v667 = vsub.f32 %v665, %v666
        %v668 = vand.u32 %v667, 4294901760
        %669 = vmatpush.msra.mxu0 %v668
        %v670 = vand.u32 %v403, 4294901760
        %v671 = vsub.f32 %v403, %v670
        %v672 = vand.u32 %v671, 4294901760
        %v673 = vsub.f32 %v671, %v672
        %v674 = vand.u32 %v673, 4294901760
        %675 = vmatpush.msra.mxu0 %v674
        %v676 = vand.u32 %v402, 4294901760
        %v677 = vsub.f32 %v402, %v676
        %v678 = vand.u32 %v677, 4294901760
        %v679 = vsub.f32 %v677, %v678
        %v680 = vand.u32 %v679, 4294901760
        %681 = vmatpush.msra.mxu0 %v680
        %v682 = vand.u32 %v401, 4294901760
        %v683 = vsub.f32 %v401, %v682
        %v684 = vand.u32 %v683, 4294901760
        %v685 = vsub.f32 %v683, %v684
        %v686 = vand.u32 %v685, 4294901760
        %687 = vmatpush.msra.mxu0 %v686
        %v688 = vand.u32 %v400, 4294901760
        %v689 = vsub.f32 %v400, %v688
        %v690 = vand.u32 %v689, 4294901760
        %v691 = vsub.f32 %v689, %v690
        %v692 = vand.u32 %v691, 4294901760
        %693 = vmatpush.msra.mxu0 %v692
        %v694 = vand.u32 %v414, 4294901760
        %695 = vmatmul.f32.gmra.mxu0 %v694
        %v696 = vpop.f32.mrf.mxu0
        %v697 = vadd.f32 %v496, %v696
        %v698 = vand.u32 %v417, 4294901760
        %699 = vmatmul.f32.gmra.mxu0 %v698
        %v700 = vpop.f32.mrf.mxu0
        %v701 = vadd.f32 %v504, %v700
        %v702 = vand.u32 %v420, 4294901760
        %703 = vmatmul.f32.gmra.mxu0 %v702
        %v704 = vpop.f32.mrf.mxu0
        %v705 = vadd.f32 %v512, %v704
        %v706 = vand.u32 %v423, 4294901760
        %707 = vmatmul.f32.gmra.mxu0 %v706
        %v708 = vpop.f32.mrf.mxu0
        %v709 = vadd.f32 %v520, %v708
        %v710 = vand.u32 %v426, 4294901760
        %711 = vmatmul.f32.gmra.mxu0 %v710
        %v712 = vpop.f32.mrf.mxu0
        %v713 = vadd.f32 %v528, %v712
        %v714 = vand.u32 %v429, 4294901760
        %715 = vmatmul.f32.gmra.mxu0 %v714
        %v716 = vpop.f32.mrf.mxu0
        %v717 = vadd.f32 %v536, %v716
        %v718 = vand.u32 %v432, 4294901760
        %719 = vmatmul.f32.gmra.mxu0 %v718
        %v720 = vpop.f32.mrf.mxu0
        %v721 = vadd.f32 %v544, %v720
        %v722 = vand.u32 %v435, 4294901760
        %723 = vmatmul.f32.gmra.mxu0 %v722
        %v724 = vpop.f32.mrf.mxu0
        %v725 = vadd.f32 %v552, %v724
        %v726 = vand.u32 %v438, 4294901760
        %727 = vmatmul.f32.gmra.mxu0 %v726
        %v728 = vpop.f32.mrf.mxu0
        %v729 = vadd.f32 %v560, %v728
        %v730 = vand.u32 %v441, 4294901760
        %731 = vmatmul.f32.gmra.mxu0 %v730
        %v732 = vpop.f32.mrf.mxu0
        %v733 = vadd.f32 %v568, %v732
        %v734 = vand.u32 %v444, 4294901760
        %735 = vmatmul.f32.gmra.mxu0 %v734
        %v736 = vpop.f32.mrf.mxu0
        %v737 = vadd.f32 %v576, %v736
        %v738 = vand.u32 %v447, 4294901760
        %739 = vmatmul.f32.gmra.mxu0 %v738
        %v740 = vpop.f32.mrf.mxu0
        %v741 = vadd.f32 %v584, %v740
        %v742 = vand.u32 %v450, 4294901760
        %743 = vmatmul.f32.gmra.mxu0 %v742
        %v744 = vpop.f32.mrf.mxu0
        %v745 = vadd.f32 %v592, %v744
        %v746 = vand.u32 %v453, 4294901760
        %747 = vmatmul.f32.gmra.mxu0 %v746
        %v748 = vpop.f32.mrf.mxu0
        %v749 = vadd.f32 %v600, %v748
        %v750 = vand.u32 %v456, 4294901760
        %751 = vmatmul.f32.gmra.mxu0 %v750
        %v752 = vpop.f32.mrf.mxu0
        %v753 = vadd.f32 %v608, %v752
        %v754 = vand.u32 %v459, 4294901760
        %755 = vmatmul.f32.gmra.mxu0 %v754
        %v756 = vpop.f32.mrf.mxu0
        %v757 = vadd.f32 %v616, %v756
        %758 = vdwg.mxu0
        %759 = vmatpush.msra.mxu0 0.0
        %760 = vmatpush.msra.mxu0 0.0
        %761 = vmatpush.msra.mxu0 0.0
        %762 = vmatpush.msra.mxu0 0.0
        %v763 = vand.u32 %v411, 4294901760
        %v764 = vsub.f32 %v411, %v763
        %765 = vmatpush.msra.mxu0 %v764
        %v766 = vand.u32 %v410, 4294901760
        %v767 = vsub.f32 %v410, %v766
        %768 = vmatpush.msra.mxu0 %v767
        %v769 = vand.u32 %v409, 4294901760
        %v770 = vsub.f32 %v409, %v769
        %771 = vmatpush.msra.mxu0 %v770
        %v772 = vand.u32 %v408, 4294901760
        %v773 = vsub.f32 %v408, %v772
        %774 = vmatpush.msra.mxu0 %v773
        %v775 = vand.u32 %v407, 4294901760
        %v776 = vsub.f32 %v407, %v775
        %777 = vmatpush.msra.mxu0 %v776
        %v778 = vand.u32 %v406, 4294901760
        %v779 = vsub.f32 %v406, %v778
        %780 = vmatpush.msra.mxu0 %v779
        %v781 = vand.u32 %v405, 4294901760
        %v782 = vsub.f32 %v405, %v781
        %783 = vmatpush.msra.mxu0 %v782
        %v784 = vand.u32 %v404, 4294901760
        %v785 = vsub.f32 %v404, %v784
        %786 = vmatpush.msra.mxu0 %v785
        %v787 = vand.u32 %v403, 4294901760
        %v788 = vsub.f32 %v403, %v787
        %789 = vmatpush.msra.mxu0 %v788
        %v790 = vand.u32 %v402, 4294901760
        %v791 = vsub.f32 %v402, %v790
        %792 = vmatpush.msra.mxu0 %v791
        %v793 = vand.u32 %v401, 4294901760
        %v794 = vsub.f32 %v401, %v793
        %795 = vmatpush.msra.mxu0 %v794
        %v796 = vand.u32 %v400, 4294901760
        %v797 = vsub.f32 %v400, %v796
        %798 = vmatpush.msra.mxu0 %v797
        %v799 = vand.u32 %v414, 4294901760
        %v800 = vsub.f32 %v414, %v799
        %801 = vmatmul.f32.gmra.mxu0 %v800
        %v802 = vpop.f32.mrf.mxu0
        %v803 = vadd.f32 %v697, %v802
        %v804 = vand.u32 %v417, 4294901760
        %v805 = vsub.f32 %v417, %v804
        %806 = vmatmul.f32.gmra.mxu0 %v805
        %v807 = vpop.f32.mrf.mxu0
        %v808 = vadd.f32 %v701, %v807
        %v809 = vand.u32 %v420, 4294901760
        %v810 = vsub.f32 %v420, %v809
        %811 = vmatmul.f32.gmra.mxu0 %v810
        %v812 = vpop.f32.mrf.mxu0
        %v813 = vadd.f32 %v705, %v812
        %v814 = vand.u32 %v423, 4294901760
        %v815 = vsub.f32 %v423, %v814
        %816 = vmatmul.f32.gmra.mxu0 %v815
        %v817 = vpop.f32.mrf.mxu0
        %v818 = vadd.f32 %v709, %v817
        %v819 = vand.u32 %v426, 4294901760
        %v820 = vsub.f32 %v426, %v819
        %821 = vmatmul.f32.gmra.mxu0 %v820
        %v822 = vpop.f32.mrf.mxu0
        %v823 = vadd.f32 %v713, %v822
        %v824 = vand.u32 %v429, 4294901760
        %v825 = vsub.f32 %v429, %v824
        %826 = vmatmul.f32.gmra.mxu0 %v825
        %v827 = vpop.f32.mrf.mxu0
        %v828 = vadd.f32 %v717, %v827
        %v829 = vand.u32 %v432, 4294901760
        %v830 = vsub.f32 %v432, %v829
        %831 = vmatmul.f32.gmra.mxu0 %v830
        %v832 = vpop.f32.mrf.mxu0
        %v833 = vadd.f32 %v721, %v832
        %v834 = vand.u32 %v435, 4294901760
        %v835 = vsub.f32 %v435, %v834
        %836 = vmatmul.f32.gmra.mxu0 %v835
        %v837 = vpop.f32.mrf.mxu0
        %v838 = vadd.f32 %v725, %v837
        %v839 = vand.u32 %v438, 4294901760
        %v840 = vsub.f32 %v438, %v839
        %841 = vmatmul.f32.gmra.mxu0 %v840
        %v842 = vpop.f32.mrf.mxu0
        %v843 = vadd.f32 %v729, %v842
        %v844 = vand.u32 %v441, 4294901760
        %v845 = vsub.f32 %v441, %v844
        %846 = vmatmul.f32.gmra.mxu0 %v845
        %v847 = vpop.f32.mrf.mxu0
        %v848 = vadd.f32 %v733, %v847
        %v849 = vand.u32 %v444, 4294901760
        %v850 = vsub.f32 %v444, %v849
        %851 = vmatmul.f32.gmra.mxu0 %v850
        %v852 = vpop.f32.mrf.mxu0
        %v853 = vadd.f32 %v737, %v852
        %v854 = vand.u32 %v447, 4294901760
        %v855 = vsub.f32 %v447, %v854
        %856 = vmatmul.f32.gmra.mxu0 %v855
        %v857 = vpop.f32.mrf.mxu0
        %v858 = vadd.f32 %v741, %v857
        %v859 = vand.u32 %v450, 4294901760
        %v860 = vsub.f32 %v450, %v859
        %861 = vmatmul.f32.gmra.mxu0 %v860
        %v862 = vpop.f32.mrf.mxu0
        %v863 = vadd.f32 %v745, %v862
        %v864 = vand.u32 %v453, 4294901760
        %v865 = vsub.f32 %v453, %v864
        %866 = vmatmul.f32.gmra.mxu0 %v865
        %v867 = vpop.f32.mrf.mxu0
        %v868 = vadd.f32 %v749, %v867
        %v869 = vand.u32 %v456, 4294901760
        %v870 = vsub.f32 %v456, %v869
        %871 = vmatmul.f32.gmra.mxu0 %v870
        %v872 = vpop.f32.mrf.mxu0
        %v873 = vadd.f32 %v753, %v872
        %v874 = vand.u32 %v459, 4294901760
        %v875 = vsub.f32 %v459, %v874
        %876 = vmatmul.f32.gmra.mxu0 %v875
        %v877 = vpop.f32.mrf.mxu0
        %v878 = vadd.f32 %v757, %v877
        %879 = vdwg.mxu0
        %880 = vmatpush.msra.mxu0 0.0
        %881 = vmatpush.msra.mxu0 0.0
        %882 = vmatpush.msra.mxu0 0.0
        %883 = vmatpush.msra.mxu0 0.0
        %v884 = vand.u32 %v411, 4294901760
        %885 = vmatpush.msra.mxu0 %v884
        %v886 = vand.u32 %v410, 4294901760
        %887 = vmatpush.msra.mxu0 %v886
        %v888 = vand.u32 %v409, 4294901760
        %889 = vmatpush.msra.mxu0 %v888
        %v890 = vand.u32 %v408, 4294901760
        %891 = vmatpush.msra.mxu0 %v890
        %v892 = vand.u32 %v407, 4294901760
        %893 = vmatpush.msra.mxu0 %v892
        %v894 = vand.u32 %v406, 4294901760
        %895 = vmatpush.msra.mxu0 %v894
        %v896 = vand.u32 %v405, 4294901760
        %897 = vmatpush.msra.mxu0 %v896
        %v898 = vand.u32 %v404, 4294901760
        %899 = vmatpush.msra.mxu0 %v898
        %v900 = vand.u32 %v403, 4294901760
        %901 = vmatpush.msra.mxu0 %v900
        %v902 = vand.u32 %v402, 4294901760
        %903 = vmatpush.msra.mxu0 %v902
        %v904 = vand.u32 %v401, 4294901760
        %905 = vmatpush.msra.mxu0 %v904
        %v906 = vand.u32 %v400, 4294901760
        %907 = vmatpush.msra.mxu0 %v906
        %v908 = vand.u32 %v414, 4294901760
        %v909 = vsub.f32 %v414, %v908
        %v910 = vand.u32 %v909, 4294901760
        %911 = vmatmul.f32.gmra.mxu0 %v910
        %v912 = vpop.f32.mrf.mxu0
        %v913 = vadd.f32 %v803, %v912
        %v914 = vand.u32 %v417, 4294901760
        %v915 = vsub.f32 %v417, %v914
        %v916 = vand.u32 %v915, 4294901760
        %917 = vmatmul.f32.gmra.mxu0 %v916
        %v918 = vpop.f32.mrf.mxu0
        %v919 = vadd.f32 %v808, %v918
        %v920 = vand.u32 %v420, 4294901760
        %v921 = vsub.f32 %v420, %v920
        %v922 = vand.u32 %v921, 4294901760
        %923 = vmatmul.f32.gmra.mxu0 %v922
        %v924 = vpop.f32.mrf.mxu0
        %v925 = vadd.f32 %v813, %v924
        %v926 = vand.u32 %v423, 4294901760
        %v927 = vsub.f32 %v423, %v926
        %v928 = vand.u32 %v927, 4294901760
        %929 = vmatmul.f32.gmra.mxu0 %v928
        %v930 = vpop.f32.mrf.mxu0
        %v931 = vadd.f32 %v818, %v930
        %v932 = vand.u32 %v426, 4294901760
        %v933 = vsub.f32 %v426, %v932
        %v934 = vand.u32 %v933, 4294901760
        %935 = vmatmul.f32.gmra.mxu0 %v934
        %v936 = vpop.f32.mrf.mxu0
        %v937 = vadd.f32 %v823, %v936
        %v938 = vand.u32 %v429, 4294901760
        %v939 = vsub.f32 %v429, %v938
        %v940 = vand.u32 %v939, 4294901760
        %941 = vmatmul.f32.gmra.mxu0 %v940
        %v942 = vpop.f32.mrf.mxu0
        %v943 = vadd.f32 %v828, %v942
        %v944 = vand.u32 %v432, 4294901760
        %v945 = vsub.f32 %v432, %v944
        %v946 = vand.u32 %v945, 4294901760
        %947 = vmatmul.f32.gmra.mxu0 %v946
        %v948 = vpop.f32.mrf.mxu0
        %v949 = vadd.f32 %v833, %v948
        %v950 = vand.u32 %v435, 4294901760
        %v951 = vsub.f32 %v435, %v950
        %v952 = vand.u32 %v951, 4294901760
        %953 = vmatmul.f32.gmra.mxu0 %v952
        %v954 = vpop.f32.mrf.mxu0
        %v955 = vadd.f32 %v838, %v954
        %v956 = vand.u32 %v438, 4294901760
        %v957 = vsub.f32 %v438, %v956
        %v958 = vand.u32 %v957, 4294901760
        %959 = vmatmul.f32.gmra.mxu0 %v958
        %v960 = vpop.f32.mrf.mxu0
        %v961 = vadd.f32 %v843, %v960
        %v962 = vand.u32 %v441, 4294901760
        %v963 = vsub.f32 %v441, %v962
        %v964 = vand.u32 %v963, 4294901760
        %965 = vmatmul.f32.gmra.mxu0 %v964
        %v966 = vpop.f32.mrf.mxu0
        %v967 = vadd.f32 %v848, %v966
        %v968 = vand.u32 %v444, 4294901760
        %v969 = vsub.f32 %v444, %v968
        %v970 = vand.u32 %v969, 4294901760
        %971 = vmatmul.f32.gmra.mxu0 %v970
        %v972 = vpop.f32.mrf.mxu0
        %v973 = vadd.f32 %v853, %v972
        %v974 = vand.u32 %v447, 4294901760
        %v975 = vsub.f32 %v447, %v974
        %v976 = vand.u32 %v975, 4294901760
        %977 = vmatmul.f32.gmra.mxu0 %v976
        %v978 = vpop.f32.mrf.mxu0
        %v979 = vadd.f32 %v858, %v978
        %v980 = vand.u32 %v450, 4294901760
        %v981 = vsub.f32 %v450, %v980
        %v982 = vand.u32 %v981, 4294901760
        %983 = vmatmul.f32.gmra.mxu0 %v982
        %v984 = vpop.f32.mrf.mxu0
        %v985 = vadd.f32 %v863, %v984
        %v986 = vand.u32 %v453, 4294901760
        %v987 = vsub.f32 %v453, %v986
        %v988 = vand.u32 %v987, 4294901760
        %989 = vmatmul.f32.gmra.mxu0 %v988
        %v990 = vpop.f32.mrf.mxu0
        %v991 = vadd.f32 %v868, %v990
        %v992 = vand.u32 %v456, 4294901760
        %v993 = vsub.f32 %v456, %v992
        %v994 = vand.u32 %v993, 4294901760
        %995 = vmatmul.f32.gmra.mxu0 %v994
        %v996 = vpop.f32.mrf.mxu0
        %v997 = vadd.f32 %v873, %v996
        %v998 = vand.u32 %v459, 4294901760
        %v999 = vsub.f32 %v459, %v998
        %v1000 = vand.u32 %v999, 4294901760
        %1001 = vmatmul.f32.gmra.mxu0 %v1000
        %v1002 = vpop.f32.mrf.mxu0
        %v1003 = vadd.f32 %v878, %v1002
        %1004 = vdwg.mxu0
        %1005 = vmatpush.msra.mxu0 0.0
        %1006 = vmatpush.msra.mxu0 0.0
        %1007 = vmatpush.msra.mxu0 0.0
        %1008 = vmatpush.msra.mxu0 0.0
        %v1009 = vand.u32 %v411, 4294901760
        %v1010 = vsub.f32 %v411, %v1009
        %v1011 = vand.u32 %v1010, 4294901760
        %1012 = vmatpush.msra.mxu0 %v1011
        %v1013 = vand.u32 %v410, 4294901760
        %v1014 = vsub.f32 %v410, %v1013
        %v1015 = vand.u32 %v1014, 4294901760
        %1016 = vmatpush.msra.mxu0 %v1015
        %v1017 = vand.u32 %v409, 4294901760
        %v1018 = vsub.f32 %v409, %v1017
        %v1019 = vand.u32 %v1018, 4294901760
        %1020 = vmatpush.msra.mxu0 %v1019
        %v1021 = vand.u32 %v408, 4294901760
        %v1022 = vsub.f32 %v408, %v1021
        %v1023 = vand.u32 %v1022, 4294901760
        %1024 = vmatpush.msra.mxu0 %v1023
        %v1025 = vand.u32 %v407, 4294901760
        %v1026 = vsub.f32 %v407, %v1025
        %v1027 = vand.u32 %v1026, 4294901760
        %1028 = vmatpush.msra.mxu0 %v1027
        %v1029 = vand.u32 %v406, 4294901760
        %v1030 = vsub.f32 %v406, %v1029
        %v1031 = vand.u32 %v1030, 4294901760
        %1032 = vmatpush.msra.mxu0 %v1031
        %v1033 = vand.u32 %v405, 4294901760
        %v1034 = vsub.f32 %v405, %v1033
        %v1035 = vand.u32 %v1034, 4294901760
        %1036 = vmatpush.msra.mxu0 %v1035
        %v1037 = vand.u32 %v404, 4294901760
        %v1038 = vsub.f32 %v404, %v1037
        %v1039 = vand.u32 %v1038, 4294901760
        %1040 = vmatpush.msra.mxu0 %v1039
        %v1041 = vand.u32 %v403, 4294901760
        %v1042 = vsub.f32 %v403, %v1041
        %v1043 = vand.u32 %v1042, 4294901760
        %1044 = vmatpush.msra.mxu0 %v1043
        %v1045 = vand.u32 %v402, 4294901760
        %v1046 = vsub.f32 %v402, %v1045
        %v1047 = vand.u32 %v1046, 4294901760
        %1048 = vmatpush.msra.mxu0 %v1047
        %v1049 = vand.u32 %v401, 4294901760
        %v1050 = vsub.f32 %v401, %v1049
        %v1051 = vand.u32 %v1050, 4294901760
        %1052 = vmatpush.msra.mxu0 %v1051
        %v1053 = vand.u32 %v400, 4294901760
        %v1054 = vsub.f32 %v400, %v1053
        %v1055 = vand.u32 %v1054, 4294901760
        %1056 = vmatpush.msra.mxu0 %v1055
        %v1057 = vand.u32 %v414, 4294901760
        %1058 = vmatmul.f32.gmra.mxu0 %v1057
        %v1059 = vpop.f32.mrf.mxu0
        %v1060 = vadd.f32 %v913, %v1059
        %v1061 = vand.u32 %v417, 4294901760
        %1062 = vmatmul.f32.gmra.mxu0 %v1061
        %v1063 = vpop.f32.mrf.mxu0
        %v1064 = vadd.f32 %v919, %v1063
        %v1065 = vand.u32 %v420, 4294901760
        %1066 = vmatmul.f32.gmra.mxu0 %v1065
        %v1067 = vpop.f32.mrf.mxu0
        %v1068 = vadd.f32 %v925, %v1067
        %v1069 = vand.u32 %v423, 4294901760
        %1070 = vmatmul.f32.gmra.mxu0 %v1069
        %v1071 = vpop.f32.mrf.mxu0
        %v1072 = vadd.f32 %v931, %v1071
        %v1073 = vand.u32 %v426, 4294901760
        %1074 = vmatmul.f32.gmra.mxu0 %v1073
        %v1075 = vpop.f32.mrf.mxu0
        %v1076 = vadd.f32 %v937, %v1075
        %v1077 = vand.u32 %v429, 4294901760
        %1078 = vmatmul.f32.gmra.mxu0 %v1077
        %v1079 = vpop.f32.mrf.mxu0
        %v1080 = vadd.f32 %v943, %v1079
        %v1081 = vand.u32 %v432, 4294901760
        %1082 = vmatmul.f32.gmra.mxu0 %v1081
        %v1083 = vpop.f32.mrf.mxu0
        %v1084 = vadd.f32 %v949, %v1083
        %v1085 = vand.u32 %v435, 4294901760
        %1086 = vmatmul.f32.gmra.mxu0 %v1085
        %v1087 = vpop.f32.mrf.mxu0
        %v1088 = vadd.f32 %v955, %v1087
        %v1089 = vand.u32 %v438, 4294901760
        %1090 = vmatmul.f32.gmra.mxu0 %v1089
        %v1091 = vpop.f32.mrf.mxu0
        %v1092 = vadd.f32 %v961, %v1091
        %v1093 = vand.u32 %v441, 4294901760
        %1094 = vmatmul.f32.gmra.mxu0 %v1093
        %v1095 = vpop.f32.mrf.mxu0
        %v1096 = vadd.f32 %v967, %v1095
        %v1097 = vand.u32 %v444, 4294901760
        %1098 = vmatmul.f32.gmra.mxu0 %v1097
        %v1099 = vpop.f32.mrf.mxu0
        %v1100 = vadd.f32 %v973, %v1099
        %v1101 = vand.u32 %v447, 4294901760
        %1102 = vmatmul.f32.gmra.mxu0 %v1101
        %v1103 = vpop.f32.mrf.mxu0
        %v1104 = vadd.f32 %v979, %v1103
        %v1105 = vand.u32 %v450, 4294901760
        %1106 = vmatmul.f32.gmra.mxu0 %v1105
        %v1107 = vpop.f32.mrf.mxu0
        %v1108 = vadd.f32 %v985, %v1107
        %v1109 = vand.u32 %v453, 4294901760
        %1110 = vmatmul.f32.gmra.mxu0 %v1109
        %v1111 = vpop.f32.mrf.mxu0
        %v1112 = vadd.f32 %v991, %v1111
        %v1113 = vand.u32 %v456, 4294901760
        %1114 = vmatmul.f32.gmra.mxu0 %v1113
        %v1115 = vpop.f32.mrf.mxu0
        %v1116 = vadd.f32 %v997, %v1115
        %v1117 = vand.u32 %v459, 4294901760
        %1118 = vmatmul.f32.gmra.mxu0 %v1117
        %v1119 = vpop.f32.mrf.mxu0
        %v1120 = vadd.f32 %v1003, %v1119
        %1121 = vdwg.mxu0
        %1122 = vmatpush.msra.mxu0 0.0
        %1123 = vmatpush.msra.mxu0 0.0
        %1124 = vmatpush.msra.mxu0 0.0
        %1125 = vmatpush.msra.mxu0 0.0
        %v1126 = vand.u32 %v411, 4294901760
        %1127 = vmatpush.msra.mxu0 %v1126
        %v1128 = vand.u32 %v410, 4294901760
        %1129 = vmatpush.msra.mxu0 %v1128
        %v1130 = vand.u32 %v409, 4294901760
        %1131 = vmatpush.msra.mxu0 %v1130
        %v1132 = vand.u32 %v408, 4294901760
        %1133 = vmatpush.msra.mxu0 %v1132
        %v1134 = vand.u32 %v407, 4294901760
        %1135 = vmatpush.msra.mxu0 %v1134
        %v1136 = vand.u32 %v406, 4294901760
        %1137 = vmatpush.msra.mxu0 %v1136
        %v1138 = vand.u32 %v405, 4294901760
        %1139 = vmatpush.msra.mxu0 %v1138
        %v1140 = vand.u32 %v404, 4294901760
        %1141 = vmatpush.msra.mxu0 %v1140
        %v1142 = vand.u32 %v403, 4294901760
        %1143 = vmatpush.msra.mxu0 %v1142
        %v1144 = vand.u32 %v402, 4294901760
        %1145 = vmatpush.msra.mxu0 %v1144
        %v1146 = vand.u32 %v401, 4294901760
        %1147 = vmatpush.msra.mxu0 %v1146
        %v1148 = vand.u32 %v400, 4294901760
        %1149 = vmatpush.msra.mxu0 %v1148
        %v1150 = vand.u32 %v414, 4294901760
        %1151 = vmatmul.f32.gmra.mxu0 %v1150
        %v1152 = vpop.f32.mrf.mxu0
        %v1153 = vadd.f32 %v1060, %v1152
        %v1154 = vand.u32 %v417, 4294901760
        %1155 = vmatmul.f32.gmra.mxu0 %v1154
        %v1156 = vpop.f32.mrf.mxu0
        %v1157 = vadd.f32 %v1064, %v1156
        %v1158 = vand.u32 %v420, 4294901760
        %1159 = vmatmul.f32.gmra.mxu0 %v1158
        %v1160 = vpop.f32.mrf.mxu0
        %v1161 = vadd.f32 %v1068, %v1160
        %v1162 = vand.u32 %v423, 4294901760
        %1163 = vmatmul.f32.gmra.mxu0 %v1162
        %v1164 = vpop.f32.mrf.mxu0
        %v1165 = vadd.f32 %v1072, %v1164
        %v1166 = vand.u32 %v426, 4294901760
        %1167 = vmatmul.f32.gmra.mxu0 %v1166
        %v1168 = vpop.f32.mrf.mxu0
        %v1169 = vadd.f32 %v1076, %v1168
        %v1170 = vand.u32 %v429, 4294901760
        %1171 = vmatmul.f32.gmra.mxu0 %v1170
        %v1172 = vpop.f32.mrf.mxu0
        %v1173 = vadd.f32 %v1080, %v1172
        %v1174 = vand.u32 %v432, 4294901760
        %1175 = vmatmul.f32.gmra.mxu0 %v1174
        %v1176 = vpop.f32.mrf.mxu0
        %v1177 = vadd.f32 %v1084, %v1176
        %v1178 = vand.u32 %v435, 4294901760
        %1179 = vmatmul.f32.gmra.mxu0 %v1178
        %v1180 = vpop.f32.mrf.mxu0
        %v1181 = vadd.f32 %v1088, %v1180
        %v1182 = vand.u32 %v438, 4294901760
        %1183 = vmatmul.f32.gmra.mxu0 %v1182
        %v1184 = vpop.f32.mrf.mxu0
        %v1185 = vadd.f32 %v1092, %v1184
        %v1186 = vand.u32 %v441, 4294901760
        %1187 = vmatmul.f32.gmra.mxu0 %v1186
        %v1188 = vpop.f32.mrf.mxu0
        %v1189 = vadd.f32 %v1096, %v1188
        %v1190 = vand.u32 %v444, 4294901760
        %1191 = vmatmul.f32.gmra.mxu0 %v1190
        %v1192 = vpop.f32.mrf.mxu0
        %v1193 = vadd.f32 %v1100, %v1192
        %v1194 = vand.u32 %v447, 4294901760
        %1195 = vmatmul.f32.gmra.mxu0 %v1194
        %v1196 = vpop.f32.mrf.mxu0
        %v1197 = vadd.f32 %v1104, %v1196
        %v1198 = vand.u32 %v450, 4294901760
        %1199 = vmatmul.f32.gmra.mxu0 %v1198
        %v1200 = vpop.f32.mrf.mxu0
        %v1201 = vadd.f32 %v1108, %v1200
        %v1202 = vand.u32 %v453, 4294901760
        %1203 = vmatmul.f32.gmra.mxu0 %v1202
        %v1204 = vpop.f32.mrf.mxu0
        %v1205 = vadd.f32 %v1112, %v1204
        %v1206 = vand.u32 %v456, 4294901760
        %1207 = vmatmul.f32.gmra.mxu0 %v1206
        %v1208 = vpop.f32.mrf.mxu0
        %v1209 = vadd.f32 %v1116, %v1208
        %v1210 = vand.u32 %v459, 4294901760
        %1211 = vmatmul.f32.gmra.mxu0 %v1210
        %v1212 = vpop.f32.mrf.mxu0
        %v1213 = vadd.f32 %v1120, %v1212
        %1214 = vdwg.mxu0
        %v1215 = vmul.f32 %v1153, 11.313708
        %v1216 = vmul.f32 %v1157, 11.313708
        %v1217 = vmul.f32 %v1161, 11.313708
        %v1218 = vmul.f32 %v1165, 11.313708
        %v1219 = vmul.f32 %v1169, 11.313708
        %v1220 = vmul.f32 %v1173, 11.313708
        %v1221 = vmul.f32 %v1177, 11.313708
        %v1222 = vmul.f32 %v1181, 11.313708
        %v1223 = vmul.f32 %v1185, 11.313708
        %v1224 = vmul.f32 %v1189, 11.313708
        %v1225 = vmul.f32 %v1193, 11.313708
        %v1226 = vmul.f32 %v1197, 11.313708
        %v1227 = vmul.f32 %v1201, 11.313708
        %v1228 = vmul.f32 %v1205, 11.313708
        %v1229 = vmul.f32 %v1209, 11.313708
        %v1230 = vmul.f32 %v1213, 11.313708
        %v1231 = vld [vmem:[%s219] sm:$0xff]
        %v1232 = vld [vmem:[%s219 + $0x8] sm:$0xff]
        %v1233 = vld [vmem:[%s219 + $0x10] sm:$0xff]
        %v1234 = vld [vmem:[%s219 + $0x18] sm:$0xff]
        %v1235 = vld [vmem:[%s219 + $0x20] sm:$0xff]
        %v1236 = vld [vmem:[%s219 + $0x28] sm:$0xff]
        %v1237 = vld [vmem:[%s219 + $0x30] sm:$0xff]
        %v1238 = vld [vmem:[%s219 + $0x38] sm:$0xff]
        %v1239 = vld [vmem:[%s219 + $0x40] sm:$0xff]
        %v1240 = vld [vmem:[%s219 + $0x48] sm:$0xff]
        %v1241 = vld [vmem:[%s219 + $0x50] sm:$0xff]
        %v1242 = vld [vmem:[%s219 + $0x58] sm:$0xff]
        %v1243 = vld [vmem:[%s219 + $0x60] sm:$0xff]
        %v1244 = vld [vmem:[%s219 + $0x68] sm:$0xff]
        %v1245 = vld [vmem:[%s219 + $0x70] sm:$0xff]
        %v1246 = vld [vmem:[%s219 + $0x78] sm:$0xff]
        %v1247 = vadd.f32 %v1215, %v1231
        %v1248 = vadd.f32 %v1216, %v1232
        %v1249 = vadd.f32 %v1217, %v1233
        %v1250 = vadd.f32 %v1218, %v1234
        %v1251 = vadd.f32 %v1219, %v1235
        %v1252 = vadd.f32 %v1220, %v1236
        %v1253 = vadd.f32 %v1221, %v1237
        %v1254 = vadd.f32 %v1222, %v1238
        %v1255 = vadd.f32 %v1223, %v1239
        %v1256 = vadd.f32 %v1224, %v1240
        %v1257 = vadd.f32 %v1225, %v1241
        %v1258 = vadd.f32 %v1226, %v1242
        %v1259 = vadd.f32 %v1227, %v1243
        %v1260 = vadd.f32 %v1228, %v1244
        %v1261 = vadd.f32 %v1229, %v1245
        %v1262 = vadd.f32 %v1230, %v1246
        %1263 = vst [vmem:[%s204] sm:$0xff] %v1247
        %1264 = vst [vmem:[%s204 + $0x8] sm:$0xff] %v1248
        %1265 = vst [vmem:[%s204 + $0x10] sm:$0xff] %v1249
        %1266 = vst [vmem:[%s204 + $0x18] sm:$0xff] %v1250
        %1267 = vst [vmem:[%s204 + $0x20] sm:$0xff] %v1251
        %1268 = vst [vmem:[%s204 + $0x28] sm:$0xff] %v1252
        %1269 = vst [vmem:[%s204 + $0x30] sm:$0xff] %v1253
        %1270 = vst [vmem:[%s204 + $0x38] sm:$0xff] %v1254
        %1271 = vst [vmem:[%s204 + $0x40] sm:$0xff] %v1255
        %1272 = vst [vmem:[%s204 + $0x48] sm:$0xff] %v1256
        %1273 = vst [vmem:[%s204 + $0x50] sm:$0xff] %v1257
        %1274 = vst [vmem:[%s204 + $0x58] sm:$0xff] %v1258
        %1275 = vst [vmem:[%s204 + $0x60] sm:$0xff] %v1259
        %1276 = vst [vmem:[%s204 + $0x68] sm:$0xff] %v1260
        %1277 = vst [vmem:[%s204 + $0x70] sm:$0xff] %v1261
        %1278 = vst [vmem:[%s204 + $0x78] sm:$0xff] %v1262
        %s1279 = sand.u32 %s114, 1
        %s1280 = scalar_lea.sflag [#allocation3], %s1279
        %s1281 = sand.u32 %s114, 1
        %s1282 = smul.addr %s1281, 128
        %s1283 = scalar_lea.vmem [#allocation2], %s1282
        // Predicated region
        $region33: #{tpu_custom_call.1} parent=31 // pred_check
          %p1284 = pneg %p124
        $region34: #{tpu_custom_call.1} parent=31 // pred_check_branch
          %1286 = sbr.rel (%p1284) target = $region36
        $region35: #{tpu_custom_call.1} parent=31 // pred_region
          %s1287 = smul.u32 16, %s21
          %1289 = vsyncadd %s1280, 0
          %s1290 = smul.addr %s22, 32
          %s1291 = sadd.s32 %s1287, %s1290
          %s1292 = smul.addr %s1291, 8
          %s1293 = scalar_lea.hbm %s3, %s1292
          %s1294 = sshll.u32 %s1283, 4
          %s1295 = int_to_ptr.vmem [resolvable:$true] %s1294
          %s1296 = sshll.u32 %s1293, 4
          %s1297 = int_to_ptr.hbm [resolvable:$true] %s1296
          %1302 = dma.vmem_to_hbm [thread:$0]  %s1295, 2048, %s1297, %s1280, 128, 128, 8
        $region36: #{tpu_custom_call.1} parent=31 // pred_fallthru
          _
      $region32: #{tpu_custom_call.1} parent=5 // pred_fallthru
        _
      %p1303 = scmp.le.s32.totalorder 2, %s12
      // Predicated region
      $region37: #{tpu_custom_call.1} parent=5 // pred_check
        %p1304 = pneg %p1303
      $region38: #{tpu_custom_call.1} parent=5 // pred_check_branch
        %1306 = sbr.rel (%p1304) target = $region40
      $region39: #{tpu_custom_call.1} parent=5 // pred_region
        %s1307 = ssub.s32 %s12, 2
        // Predicated region
        $region41: #{tpu_custom_call.1} parent=39 // pred_check
          %p1308 = pneg %p130
        $region42: #{tpu_custom_call.1} parent=39 // pred_check_branch
          %1310 = sbr.rel (%p1308) target = $region44
        $region43: #{tpu_custom_call.1} parent=39 // pred_region
          %s1311 = sand.u32 %s115, 1
          %s1312 = scalar_lea.sflag [#allocation3], %s1311
          %s1313 = sand.u32 %s115, 1
          %s1314 = smul.addr %s1313, 128
          %s1315 = scalar_lea.vmem [#allocation2], %s1314
          %1317 = dma.done %s1312, 2048
        $region44: #{tpu_custom_call.1} parent=39 // pred_fallthru
          _
      $region40: #{tpu_custom_call.1} parent=5 // pred_fallthru
        _
    $region6: #{tpu_custom_call.1} parent=1 // loop_footer
      %s16 = sadd.s32 1, %s12
    $region7: #{tpu_custom_call.1} parent=1 // loop_footer_branch
      %11 = sbr.rel target = $region3
    $region8: #{tpu_custom_call.1} parent=1 // loop_exit
      _
    %1318 = vsyncpa [#allocation3], 1
    %s1319 = scalar_lea.sflag [#allocation3], 1
    %1320 = vsyncpa %s1319, 1

</llo_original>
